<compile_context>
chip_gen: v5e
topology: v5e:2x2
jax: 0.10.0
libtpu: 0.0.40
codegen_flags: <defaults>
</compile_context>

<pallas_src>
import jax
import jax.numpy as jnp
from jax import lax
from jax.experimental import pallas as pl
from jax.experimental.pallas import tpu as pltpu


def mlp_kernel(x_ref, w1_ref, b1_ref, w2_ref, b2_ref, w3_ref, b3_ref, o_ref):
    # Entire 3-layer MLP for one batch tile, fused in VMEM.
    x = x_ref[...]                                                    # (tb, D) f32
    # Layer 1: bf16 MXU operands, f32 accumulation; bias/ReLU in f32 on the VPU.
    h1 = jnp.dot(x.astype(jnp.bfloat16), w1_ref[...],
                 preferred_element_type=jnp.float32)                  # (tb, H)
    h1 = jnp.maximum(h1 + b1_ref[...], 0.0)
    # Layer 2.
    h2 = jnp.dot(h1.astype(jnp.bfloat16), w2_ref[...],
                 preferred_element_type=jnp.float32)                  # (tb, H)
    h2 = jnp.maximum(h2 + b2_ref[...], 0.0)
    # Final 1-wide layer: contract (1, H) with (tb, H) over H -> lane-dense
    # (1, tb) row straight off the MXU (no (tb, 1) column, no masked stores).
    out = lax.dot_general(
        w3_ref[...], h2.astype(jnp.bfloat16),
        dimension_numbers=(((1,), (1,)), ((), ())),
        preferred_element_type=jnp.float32,
    )                                                                  # (1, tb)
    o_ref[...] = (out + b3_ref[0]).astype(o_ref.dtype)                 # (1, tb)


def _round_up(n, m):
    return ((n + m - 1) // m) * m


def mlp_forward(x, params, tb=256):
    """Fused MLP forward, tiled over the batch dimension.

    tb: target batch tile (rows).  256 amortizes the ~0.35us/step pipeline
    overhead while keeping the fused h1/h2 intermediates inside the 64-vreg
    file; this kernel is MXU-pass / store bound at D=16, H=32 (the per-tile x
    DMA is only tens of KB), so larger tiles do not help.  The effective tile
    is additionally capped so the grid has >= 4 steps when the batch allows
    it, keeping both v7x TensorCores busy with >= 2 pipelined steps each.
    """
    w1, b1, w2, b2, w3, b3 = params
    B, D = x.shape
    H = w1.shape[1]

    # MXU operands in bf16 (f32 accumulation happens in the kernel); biases in
    # f32; final bias as a 1-element SMEM scalar (no padded VMEM tile for it).
    w1_bf = w1.astype(jnp.bfloat16)
    w2_bf = w2.astype(jnp.bfloat16)
    w3_row = w3.reshape(1, H).astype(jnp.bfloat16)
    b1_r = b1.reshape(1, H).astype(jnp.float32)
    b2_r = b2.reshape(1, H).astype(jnp.float32)
    b3_s = b3.reshape(1).astype(jnp.float32)

    # Effective batch tile: multiple of 8 sublanes, capped so the grid has
    # >= 4 steps when B is large enough (megacore + pipelining on v7x).
    tb = max(8, _round_up(tb, 8))
    tb_cap = _round_up(pl.cdiv(B, 4), 8)
    tb_eff = min(tb, tb_cap)
    Bp = _round_up(B, tb_eff)
    if Bp != B:
        # Zero-pad the ragged batch tail; padded rows are sliced off below.
        x = jnp.pad(x, ((0, Bp - B), (0, 0)))
    n_tiles = Bp // tb_eff

    flops = 2 * B * (D * H + H * H + H)
    bytes_accessed = (B * D * 4 + B * 4                      # x in, y out
                      + (D * H + H * H + H) * 2              # bf16 weights
                      + (2 * H + 1) * 4)                     # f32 biases
    cost = pl.CostEstimate(flops=flops, transcendentals=0,
                           bytes_accessed=bytes_accessed)

    out = pl.pallas_call(
        mlp_kernel,
        out_shape=jax.ShapeDtypeStruct((n_tiles, 1, tb_eff), jnp.float32),
        grid_spec=pltpu.PrefetchScalarGridSpec(
            num_scalar_prefetch=0,
            grid=(n_tiles,),
            in_specs=[
                pl.BlockSpec((tb_eff, D), lambda i: (i, 0)),   # x tile (double-buffered)
                pl.BlockSpec((D, H), lambda i: (0, 0)),        # W1 (VMEM-resident, bf16)
                pl.BlockSpec((1, H), lambda i: (0, 0)),        # b1 (resident, f32)
                pl.BlockSpec((H, H), lambda i: (0, 0)),        # W2 (resident, bf16)
                pl.BlockSpec((1, H), lambda i: (0, 0)),        # b2 (resident, f32)
                pl.BlockSpec((1, H), lambda i: (0, 0)),        # W3 row (resident, bf16)
                pl.BlockSpec(memory_space=pltpu.MemorySpace.SMEM),  # b3 scalar
            ],
            # Lane-dense output: one (1, tb_eff) row per grid step; leading
            # grid dim is squeezed out of the kernel view.
            out_specs=pl.BlockSpec((None, 1, tb_eff), lambda i: (i, 0, 0)),
        ),
        compiler_params=pltpu.CompilerParams(
            # Megacore: shard batch grid across TensorCores (matters on v7x).
            dimension_semantics=("parallel",),
            # Pin the scoped VMEM budget explicitly (resident weights + two
            # double-buffered x tiles + output rows are tiny at these shapes,
            # but v7x only has 64 MiB total VMEM per TC).
            vmem_limit_bytes=32 * 1024 * 1024,
        ),
        cost_estimate=cost,
    )(x, w1_bf, b1_r, w2_bf, b2_r, w3_row, b3_s)

    # (n_tiles, 1, tb_eff) -> (Bp,), drop batch padding.
    # TODO(synk): torch's .squeeze() would also drop the batch dim when B == 1
    # (returning a 0-d scalar); we keep shape (B,) for usability.
    return out.reshape(-1)[:B]


def init_params(key, input_dim, hidden_dim=32):
    """Deterministic synthetic parameters (shapes match the nn.Linear layers)."""
    k1, k2, k3, k4, k5, k6 = jax.random.split(key, 6)
    w1 = jax.random.normal(k1, (input_dim, hidden_dim), jnp.float32) * 0.1
    b1 = jax.random.normal(k2, (1, hidden_dim), jnp.float32) * 0.1
    w2 = jax.random.normal(k3, (hidden_dim, hidden_dim), jnp.float32) * 0.1
    b2 = jax.random.normal(k4, (1, hidden_dim), jnp.float32) * 0.1
    w3 = jax.random.normal(k5, (hidden_dim, 1), jnp.float32) * 0.1
    b3 = jax.random.normal(k6, (1, 1), jnp.float32) * 0.1
    return (w1, b1, w2, b2, w3, b3)


def mlp_reference_f32(x, params):
    """Pure-f32 reference (matches the torch module exactly)."""
    w1, b1, w2, b2, w3, b3 = params
    h1 = jnp.maximum(x @ w1 + b1, 0.0)
    h2 = jnp.maximum(h1 @ w2 + b2, 0.0)
    return (h2 @ w3 + b3).squeeze(-1)


def mlp_reference_bf16(x, params):
    """Reference mirroring the kernel's numerics: bf16 MXU operands, f32 accum."""
    w1, b1, w2, b2, w3, b3 = params
    bf = jnp.bfloat16
    h1 = jnp.dot(x.astype(bf), w1.astype(bf), preferred_element_type=jnp.float32) + b1
    h1 = jnp.maximum(h1, 0.0)
    h2 = jnp.dot(h1.astype(bf), w2.astype(bf), preferred_element_type=jnp.float32) + b2
    h2 = jnp.maximum(h2, 0.0)
    out = jnp.dot(h2.astype(bf), w3.astype(bf), preferred_element_type=jnp.float32) + b3
    return out.squeeze(-1)


if __name__ == "__main__":
    key = jax.random.PRNGKey(0)
    kx, kp = jax.random.split(key)

    batch, input_dim, hidden_dim = 8, 16, 32
    x = jax.random.normal(kx, (batch, input_dim), jnp.float32)
    params = init_params(kp, input_dim, hidden_dim)

    # Small-shape check (single padded tile).
    y = jax.block_until_ready(mlp_forward(x, params))
    assert y.shape == (batch,), y.shape
    assert jnp.allclose(y, mlp_reference_bf16(x, params), atol=2e-3, rtol=2e-3), \
        "mismatch vs bf16-mirroring reference"
    assert jnp.allclose(y, mlp_reference_f32(x, params), atol=3e-2, rtol=3e-2), \
        "mismatch vs f32 reference"

    # Ragged-batch / multi-step-grid check (exercises padding + >=4-step grid).
    batch2 = 300
    x2 = jax.random.normal(jax.random.PRNGKey(1), (batch2, input_dim), jnp.float32)
    y2 = jax.block_until_ready(mlp_forward(x2, params, tb=128))
    assert y2.shape == (batch2,), y2.shape
    assert jnp.allclose(y2, mlp_reference_bf16(x2, params), atol=2e-3, rtol=2e-3), \
        "mismatch vs bf16-mirroring reference (ragged)"

    print("KERNEL_OK")
</pallas_src>

<mosaic_0001>
module attributes {stable_mosaic.version = 11 : i64} {
  func.func @mlp_kernel(%arg0: i32, %arg1: memref<8x16xf32, #tpu.memory_space<vmem>>, %arg2: memref<16x32xbf16, #tpu.memory_space<vmem>>, %arg3: memref<1x32xf32, #tpu.memory_space<vmem>>, %arg4: memref<32x32xbf16, #tpu.memory_space<vmem>>, %arg5: memref<1x32xf32, #tpu.memory_space<vmem>>, %arg6: memref<1x32xbf16, #tpu.memory_space<vmem>>, %arg7: memref<1xf32, #tpu.memory_space<smem>>, %arg8: memref<1x1x8xf32, #tpu.memory_space<vmem>>) attributes {dimension_semantics = [#tpu.dimension_semantics<parallel>], iteration_bounds = array<i64: 1>, scalar_prefetch = 0 : i64, scratch_operands = 0 : i64, tpu.core_type = #tpu.core_type<tc>, window_params = [{transform_indices = @transform_0, window_bounds = array<i64: 8, 16>}, {pipeline_mode = #tpu.pipeline_mode<synchronous>, transform_indices = @transform_1, window_bounds = array<i64: 16, 32>}, {pipeline_mode = #tpu.pipeline_mode<synchronous>, transform_indices = @transform_2, window_bounds = array<i64: 1, 32>}, {pipeline_mode = #tpu.pipeline_mode<synchronous>, transform_indices = @transform_3, window_bounds = array<i64: 32, 32>}, {pipeline_mode = #tpu.pipeline_mode<synchronous>, transform_indices = @transform_4, window_bounds = array<i64: 1, 32>}, {pipeline_mode = #tpu.pipeline_mode<synchronous>, transform_indices = @transform_5, window_bounds = array<i64: 1, 32>}, {transform_indices = @transform_6, window_bounds = array<i64: 1>}, {transform_indices = @transform_7, window_bounds = array<i64: 1, 1, 8>}]} {
    %c0 = arith.constant 0 : index
    %c0_0 = arith.constant 0 : index
    %0 = vector.load %arg1[%c0, %c0_0] : memref<8x16xf32, #tpu.memory_space<vmem>>, vector<8x16xf32>
    %1 = arith.truncf %0 : vector<8x16xf32> to vector<8x16xbf16>
    %c0_1 = arith.constant 0 : index
    %c0_2 = arith.constant 0 : index
    %2 = vector.load %arg2[%c0_1, %c0_2] : memref<16x32xbf16, #tpu.memory_space<vmem>>, vector<16x32xbf16>
    %cst = arith.constant dense<0.000000e+00> : vector<8x32xf32>
    %3 = tpu.matmul %1, %2, %cst {dimension_numbers = #tpu.dot_dimension_numbers<[1], [0], [0], [1], [0, 0, 1, 1], [], []>} : vector<8x16xbf16>, vector<16x32xbf16>, vector<8x32xf32> -> vector<8x32xf32>
    %c0_3 = arith.constant 0 : index
    %c0_4 = arith.constant 0 : index
    %4 = vector.load %arg3[%c0_3, %c0_4] : memref<1x32xf32, #tpu.memory_space<vmem>>, vector<1x32xf32>
    %5 = vector.broadcast %4 : vector<1x32xf32> to vector<8x32xf32>
    %6 = arith.addf %3, %5 : vector<8x32xf32>
    %cst_5 = arith.constant 0.000000e+00 : f32
    %7 = vector.broadcast %cst_5 : f32 to vector<8x32xf32>
    %8 = arith.maximumf %6, %7 : vector<8x32xf32>
    %9 = arith.truncf %8 : vector<8x32xf32> to vector<8x32xbf16>
    %c0_6 = arith.constant 0 : index
    %c0_7 = arith.constant 0 : index
    %10 = vector.load %arg4[%c0_6, %c0_7] : memref<32x32xbf16, #tpu.memory_space<vmem>>, vector<32x32xbf16>
    %cst_8 = arith.constant dense<0.000000e+00> : vector<8x32xf32>
    %11 = tpu.matmul %9, %10, %cst_8 {dimension_numbers = #tpu.dot_dimension_numbers<[1], [0], [0], [1], [0, 0, 1, 1], [], []>} : vector<8x32xbf16>, vector<32x32xbf16>, vector<8x32xf32> -> vector<8x32xf32>
    %c0_9 = arith.constant 0 : index
    %c0_10 = arith.constant 0 : index
    %12 = vector.load %arg5[%c0_9, %c0_10] : memref<1x32xf32, #tpu.memory_space<vmem>>, vector<1x32xf32>
    %13 = vector.broadcast %12 : vector<1x32xf32> to vector<8x32xf32>
    %14 = arith.addf %11, %13 : vector<8x32xf32>
    %cst_11 = arith.constant 0.000000e+00 : f32
    %15 = vector.broadcast %cst_11 : f32 to vector<8x32xf32>
    %16 = arith.maximumf %14, %15 : vector<8x32xf32>
    %c0_12 = arith.constant 0 : index
    %c0_13 = arith.constant 0 : index
    %17 = vector.load %arg6[%c0_12, %c0_13] : memref<1x32xbf16, #tpu.memory_space<vmem>>, vector<1x32xbf16>
    %18 = arith.truncf %16 : vector<8x32xf32> to vector<8x32xbf16>
    %cst_14 = arith.constant dense<0.000000e+00> : vector<1x8xf32>
    %19 = tpu.matmul %17, %18, %cst_14 {dimension_numbers = #tpu.dot_dimension_numbers<[1], [1], [0], [0], [0, 0, 1, 0], [], []>} : vector<1x32xbf16>, vector<8x32xbf16>, vector<1x8xf32> -> vector<1x8xf32>
    %c0_15 = arith.constant 0 : index
    %20 = memref.load %arg7[%c0_15] : memref<1xf32, #tpu.memory_space<smem>>
    %21 = vector.broadcast %20 : f32 to vector<1x8xf32>
    %22 = arith.addf %19, %21 : vector<1x8xf32>
    %c0_16 = arith.constant 0 : index
    %c0_17 = arith.constant 0 : index
    %c0_18 = arith.constant 0 : index
    %23 = vector.load %arg8[%c0_16, %c0_17, %c0_18] : memref<1x1x8xf32, #tpu.memory_space<vmem>>, vector<1x1x8xf32>
    %24 = vector.shape_cast %23 : vector<1x1x8xf32> to vector<1x8xf32>
    %25 = vector.shape_cast %22 : vector<1x8xf32> to vector<1x1x8xf32>
    tpu.vector_store %arg8[%c0_16, %c0_17, %c0_18], %25 {strides = array<i32>} : memref<1x1x8xf32, #tpu.memory_space<vmem>>, vector<1x1x8xf32>,
    return
  }
  func.func @transform_0(%arg0: i32) -> (i32, i32) {
    %c0_i32 = arith.constant 0 : i32
    %c0_i32_0 = arith.constant 0 : i32
    return %arg0, %c0_i32 : i32, i32
  }
  func.func @transform_1(%arg0: i32) -> (i32, i32) {
    %c0_i32 = arith.constant 0 : i32
    %c0_i32_0 = arith.constant 0 : i32
    %c0_i32_1 = arith.constant 0 : i32
    return %c0_i32, %c0_i32_0 : i32, i32
  }
  func.func @transform_2(%arg0: i32) -> (i32, i32) {
    %c0_i32 = arith.constant 0 : i32
    %c0_i32_0 = arith.constant 0 : i32
    %c0_i32_1 = arith.constant 0 : i32
    return %c0_i32, %c0_i32_0 : i32, i32
  }
  func.func @transform_3(%arg0: i32) -> (i32, i32) {
    %c0_i32 = arith.constant 0 : i32
    %c0_i32_0 = arith.constant 0 : i32
    %c0_i32_1 = arith.constant 0 : i32
    return %c0_i32, %c0_i32_0 : i32, i32
  }
  func.func @transform_4(%arg0: i32) -> (i32, i32) {
    %c0_i32 = arith.constant 0 : i32
    %c0_i32_0 = arith.constant 0 : i32
    %c0_i32_1 = arith.constant 0 : i32
    return %c0_i32, %c0_i32_0 : i32, i32
  }
  func.func @transform_5(%arg0: i32) -> (i32, i32) {
    %c0_i32 = arith.constant 0 : i32
    %c0_i32_0 = arith.constant 0 : i32
    %c0_i32_1 = arith.constant 0 : i32
    return %c0_i32, %c0_i32_0 : i32, i32
  }
  func.func @transform_6(%arg0: i32) -> i32 {
    %c0_i32 = arith.constant 0 : i32
    %c0_i32_0 = arith.constant 0 : i32
    return %c0_i32 : i32
  }
  func.func @transform_7(%arg0: i32) -> (i32, i32, i32) {
    %c0_i32 = arith.constant 0 : i32
    %c0_i32_0 = arith.constant 0 : i32
    %c0_i32_1 = arith.constant 0 : i32
    return %arg0, %c0_i32, %c0_i32_0 : i32, i32, i32
  }
}

</mosaic_0001>

<llo_original>
// kernel: tpu_custom_call.1
$region0: #{tpu_custom_call.1}
  #allocation0 [shape = 'u32[]', space=smem, size = 0x4, offset = 0x4, fixed_abs, tag = 'smem constant byte address 0x4 - core index']
  #allocation1 [shape = 'u32[72,128]{1,0:T(1,128)}', space=vmem, size = 0x9000, scoped, tag = 'internal scratch']
  #allocation2 [shape = 'f32[1]{0:T(128)S(6)}', space=smem, size = 0x200, scoped, tag = 'scoped memory for tpu_custom_call.1']
  %s0 = inlined_call_operand.hbm [shape: f32[8,16], index: 0, kind: input, shape index: {}]
  %s1 = inlined_call_operand.hbm [shape: bf16[16,32], index: 1, kind: input, shape index: {}]
  %s2 = inlined_call_operand.vmem [shape: f32[1,32], index: 2, kind: input, shape index: {}]
  %s3 = inlined_call_operand.hbm [shape: bf16[32,32], index: 3, kind: input, shape index: {}]
  %s4 = inlined_call_operand.vmem [shape: f32[1,32], index: 4, kind: input, shape index: {}]
  %s5 = inlined_call_operand.vmem [shape: bf16[1,32], index: 5, kind: input, shape index: {}]
  %s6 = inlined_call_operand.<no memory space> [shape: f32[1], index: 6, kind: input, shape index: {}]
  %s7 = inlined_call_operand.hbm [shape: f32[1,1,8], index: 7, kind: output, shape index: {}]
  %s8 = sld [smem:[#allocation0]]
  $region50: #{tpu_custom_call.1} parent=0
    _
  %s10 = ssub.s32 1, %s8
  %s11 = scalar_select 0, %s10, %s8
  %12 = sst [smem:[#allocation2]] %s6
  $region1: #{tpu_custom_call.1} parent=0
    #allocation3 [shape = 'u8[4096]{0}', space=vmem, size = 0x1000, scoped, tag = 'input window, operand 0, single buffered']
    #allocation4 [shape = 's32[1]{0}', space=sflag, size = 0x4, scoped, tag = 'scoped memory for tpu_custom_call.1']
    #allocation5 [shape = 's32[1]{0}', space=sflag, size = 0x4, scoped, tag = 'scoped memory for tpu_custom_call.1']
    #allocation6 [shape = 'u8[4096]{0}', space=vmem, size = 0x1000, scoped, tag = 'input window, operand 1, single buffered']
    #allocation7 [shape = 's32[1]{0}', space=sflag, size = 0x4, scoped, tag = 'scoped memory for tpu_custom_call.1']
    #allocation8 [shape = 'u8[8192]{0}', space=vmem, size = 0x2000, scoped, tag = 'input window, operand 3, single buffered']
    #allocation9 [shape = 'u8[512]{0}', space=vmem, size = 0x400, scoped, tag = 'output window, operand 0, single buffered']
    %13 = vsyncpa [#allocation4], 0
    %14 = vsyncpa [#allocation7], 0
    %15 = vsyncpa [#allocation5], 0
    // Predicated region
    $region2: #{tpu_custom_call.1} parent=1 // pred_check
      _
    $region3: #{tpu_custom_call.1} parent=1 // pred_check_branch
      %17 = sbr.rel (0) target = $region5
    $region4: #{tpu_custom_call.1} parent=1 // pred_region
      %19 = vsyncadd [#allocation4], 0
      %s21 = sshll.u32 %s0, 4
      %s22 = int_to_ptr.hbm [resolvable:$true] %s21
      %s23 = sshll.u32 [#allocation3], 4
      %s24 = int_to_ptr.vmem [resolvable:$true] %s23
      %26 = dma.hbm_to_vmem [thread:$0]  %s22, 128, %s24, [#allocation4]
    $region5: #{tpu_custom_call.1} parent=1 // pred_fallthru
      _
    // Predicated region
    $region6: #{tpu_custom_call.1} parent=1 // pred_check
      _
    $region7: #{tpu_custom_call.1} parent=1 // pred_check_branch
      %28 = sbr.rel (0) target = $region9
    $region8: #{tpu_custom_call.1} parent=1 // pred_region
      %30 = vsyncadd [#allocation7], 0
      %s31 = sshll.u32 %s1, 4
      %s32 = int_to_ptr.hbm [resolvable:$true] %s31
      %s33 = sshll.u32 [#allocation6], 4
      %s34 = int_to_ptr.vmem [resolvable:$true] %s33
      %39 = dma.hbm_to_vmem [thread:$0]  %s32, 128, %s34, [#allocation7], 64, 64, 4
    $region9: #{tpu_custom_call.1} parent=1 // pred_fallthru
      _
    // Predicated region
    $region10: #{tpu_custom_call.1} parent=1 // pred_check
      _
    $region11: #{tpu_custom_call.1} parent=1 // pred_check_branch
      %41 = sbr.rel (0) target = $region13
    $region12: #{tpu_custom_call.1} parent=1 // pred_region
      _
    $region13: #{tpu_custom_call.1} parent=1 // pred_fallthru
      _
    // Predicated region
    $region14: #{tpu_custom_call.1} parent=1 // pred_check
      _
    $region15: #{tpu_custom_call.1} parent=1 // pred_check_branch
      %43 = sbr.rel (0) target = $region17
    $region16: #{tpu_custom_call.1} parent=1 // pred_region
      %45 = vsyncadd [#allocation7], 0
      %s46 = sshll.u32 %s3, 4
      %s47 = int_to_ptr.hbm [resolvable:$true] %s46
      %s48 = sshll.u32 [#allocation8], 4
      %s49 = int_to_ptr.vmem [resolvable:$true] %s48
      %54 = dma.hbm_to_vmem [thread:$0]  %s47, 256, %s49, [#allocation7], 64, 64, 4
    $region17: #{tpu_custom_call.1} parent=1 // pred_fallthru
      _
    // Predicated region
    $region18: #{tpu_custom_call.1} parent=1 // pred_check
      _
    $region19: #{tpu_custom_call.1} parent=1 // pred_check_branch
      %56 = sbr.rel (0) target = $region21
    $region20: #{tpu_custom_call.1} parent=1 // pred_region
      _
    $region21: #{tpu_custom_call.1} parent=1 // pred_fallthru
      _
    // Predicated region
    $region22: #{tpu_custom_call.1} parent=1 // pred_check
      _
    $region23: #{tpu_custom_call.1} parent=1 // pred_check_branch
      %58 = sbr.rel (0) target = $region25
    $region24: #{tpu_custom_call.1} parent=1 // pred_region
      _
    $region25: #{tpu_custom_call.1} parent=1 // pred_fallthru
      _
    // Predicated region
    $region26: #{tpu_custom_call.1} parent=1 // pred_check
      _
    $region27: #{tpu_custom_call.1} parent=1 // pred_check_branch
      %60 = sbr.rel (0) target = $region29
    $region28: #{tpu_custom_call.1} parent=1 // pred_region
      _
    $region29: #{tpu_custom_call.1} parent=1 // pred_fallthru
      _
    // Predicated region
    $region30: #{tpu_custom_call.1} parent=1 // pred_check
      _
    $region31: #{tpu_custom_call.1} parent=1 // pred_check_branch
      %62 = sbr.rel (0) target = $region33
    $region32: #{tpu_custom_call.1} parent=1 // pred_region
      %64 = dma.done [#allocation4], 128
    $region33: #{tpu_custom_call.1} parent=1 // pred_fallthru
      _
    // Predicated region
    $region34: #{tpu_custom_call.1} parent=1 // pred_check
      _
    $region35: #{tpu_custom_call.1} parent=1 // pred_check_branch
      %66 = sbr.rel (0) target = $region37
    $region36: #{tpu_custom_call.1} parent=1 // pred_region
      %68 = dma.done [#allocation7], 128
    $region37: #{tpu_custom_call.1} parent=1 // pred_fallthru
      _
    // Predicated region
    $region38: #{tpu_custom_call.1} parent=1 // pred_check
      _
    $region39: #{tpu_custom_call.1} parent=1 // pred_check_branch
      %70 = sbr.rel (0) target = $region41
    $region40: #{tpu_custom_call.1} parent=1 // pred_region
      %72 = dma.done [#allocation7], 256
    $region41: #{tpu_custom_call.1} parent=1 // pred_fallthru
      _
    %v74 = vld [vmem:[#allocation3] sm:$0xff]
    %v75 = vpack.c.bf16 %v74, %v74
    %v76 = vld [vmem:[#allocation6] sm:$0xf]
    %v77 = vld [vmem:[#allocation6 + $0x4] sm:$0xf]
    %v78 = vld [vmem:[%s2] sm:$0x1]
    %v80 = vperm.slane %v78, 0
    %v84 = vunpack.c.l.b16 %v76
    %v85 = vunpack.c.l.b16 %v77
    %v86 = vpack.c.b16 %v85, %v84
    %vm88 = vcmask 130048
    %v90 = vsel %vm88, %v75, 0
    %92 = vmatpush.bf16.msra.mxu0 0
    %93 = vmatpush.bf16.msra.mxu0 0
    %94 = vmatpush.bf16.msra.mxu0 0
    %95 = vmatpush.bf16.msra.mxu0 0
    %96 = vmatpush.bf16.msra.mxu0 0
    %97 = vmatpush.bf16.msra.mxu0 0
    %98 = vmatpush.bf16.msra.mxu0 0
    %99 = vmatpush.bf16.msra.mxu0 %v86
    %100 = vmatmul.bf16.gmra.mxu0 %v90
    %v101 = vpop.f32.mrf.mxu0
    %v102 = vadd.f32 %v80, %v101
    %v103 = vpop.f32.mrf.mxu0
    %104 = vdwg.mxu0
    %v105 = vmax.f32 %v102, 0.0
    %v106 = vpack.c.bf16 %v105, %v105
    %v107 = vld [vmem:[#allocation8] sm:$0xf]
    %v108 = vld [vmem:[#allocation8 + $0x4] sm:$0xf]
    %v109 = vld [vmem:[#allocation8 + $0x8] sm:$0xf]
    %v110 = vld [vmem:[#allocation8 + $0xc] sm:$0xf]
    %v111 = vld [vmem:[%s4] sm:$0x1]
    %v113 = vperm.slane %v111, 0
    %v119 = vunpack.c.l.b16 %v107
    %v120 = vunpack.c.l.b16 %v108
    %v121 = vunpack.c.l.b16 %v109
    %v122 = vunpack.c.l.b16 %v110
    %v123 = vpack.c.b16 %v120, %v119
    %v124 = vpack.c.b16 %v122, %v121
    %vm127 = vcmask 261120
    %v129 = vsel %vm127, %v106, 0
    %131 = vmatpush.bf16.msra.mxu0 0
    %132 = vmatpush.bf16.msra.mxu0 0
    %133 = vmatpush.bf16.msra.mxu0 0
    %134 = vmatpush.bf16.msra.mxu0 0
    %135 = vmatpush.bf16.msra.mxu0 0
    %136 = vmatpush.bf16.msra.mxu0 0
    %137 = vmatpush.bf16.msra.mxu0 %v124
    %138 = vmatpush.bf16.msra.mxu0 %v123
    %139 = vmatmul.bf16.gmra.mxu0 %v129
    %v140 = vpop.f32.mrf.mxu0
    %v141 = vadd.f32 %v113, %v140
    %v142 = vpop.f32.mrf.mxu0
    %143 = vdwg.mxu0
    %v144 = vmax.f32 %v141, 0.0
    %v145 = vld [vmem:[%s5] sm:$0x1]
    %v146 = vpack.c.bf16 %v144, %v144
    %s147 = sld [smem:[#allocation2]]
    %v148 = vstv %s147
    %v150 = vsel %vm127, %v145, 0
    %v153 = vsel %vm127, %v146, 0
    %155 = vmatpush.bf16.xpose.msra.mxu0 0
    %156 = vmatpush.bf16.xpose.msra.mxu0 0
    %157 = vmatpush.bf16.xpose.msra.mxu0 0
    %158 = vmatpush.bf16.xpose.msra.mxu0 0
    %159 = vmatpush.bf16.xpose.msra.mxu0 0
    %160 = vmatpush.bf16.xpose.msra.mxu0 0
    %161 = vmatpush.bf16.xpose.msra.mxu0 0
    %162 = vmatpush.bf16.xpose.msra.mxu0 %v153
    %163 = vmatmul.bf16.gmra.mxu0 %v150
    %v164 = vpop.f32.mrf.mxu0
    %v165 = vadd.f32 %v148, %v164
    %v166 = vpop.f32.mrf.mxu0
    %167 = vdwg.mxu0
    %vm168 = vcmask 57344
    %169 = vst.msk [vmem:[#allocation9] sm:$0x1] %vm168, %v165
    // Predicated region
    $region42: #{tpu_custom_call.1} parent=1 // pred_check
      _
    $region43: #{tpu_custom_call.1} parent=1 // pred_check_branch
      %171 = sbr.rel (0) target = $region45
    $region44: #{tpu_custom_call.1} parent=1 // pred_region
      %173 = vsyncadd [#allocation5], 0
      %s175 = sshll.u32 [#allocation9], 4
      %s176 = int_to_ptr.vmem [resolvable:$true] %s175
      %s177 = sshll.u32 %s7, 4
      %s178 = int_to_ptr.hbm [resolvable:$true] %s177
      %180 = dma.vmem_to_hbm [thread:$0]  %s176, 16, %s178, [#allocation5]
    $region45: #{tpu_custom_call.1} parent=1 // pred_fallthru
      _
    // Predicated region
    $region46: #{tpu_custom_call.1} parent=1 // pred_check
      _
    $region47: #{tpu_custom_call.1} parent=1 // pred_check_branch
      %182 = sbr.rel (0) target = $region49
    $region48: #{tpu_custom_call.1} parent=1 // pred_region
      %184 = dma.done [#allocation5], 16
    $region49: #{tpu_custom_call.1} parent=1 // pred_fallthru
      _
    %185 = vsyncpa [#allocation4], 1
    %186 = vsyncpa [#allocation7], 1
    %187 = vsyncpa [#allocation5], 1

</llo_original>
